<compile_context>
chip_gen: v7x
topology: tpu7x:2x2x1
jax: 0.10.0
libtpu: 0.0.40
codegen_flags: <defaults>
</compile_context>

<pallas_src>
import jax
import jax.numpy as jnp
from jax import lax
from jax.experimental import pallas as pl
from jax.experimental.pallas import tpu as pltpu


def _round_up(n: int, m: int) -> int:
    return ((n + m - 1) // m) * m


def _folded_gemv_kernel(x_ref, w_ref, b_ref, o_ref):
    # x_ref: (TB, F) f32 VMEM   -- batch tile, features on lanes
    # w_ref: (1, F)  f32 VMEM   -- folded weight row (resident across grid)
    # b_ref: (1, 1)  f32 SMEM   -- folded bias scalar
    # o_ref: (1, 1, TB) f32 VMEM -- lane-dense output (batch on lane axis)
    z = lax.dot_general(
        w_ref[...], x_ref[...],
        dimension_numbers=(((1,), (1,)), ((), ())),   # contract feature axis
        preferred_element_type=jnp.float32,
    ) + b_ref[0, 0]                                    # (1, TB)
    # sigmoid(z) = 0.5*tanh(0.5*z) + 0.5  (EUP transcendental, no VPU divide)
    o_ref[0] = 0.5 * jnp.tanh(0.5 * z) + 0.5


def logistic_reg_forward(x, w1, b1, w2, b2, *, block_rows: int = 256):
    """x: (B, F) f32; w1: (F, 20); b1: (1, 20); w2: (20, 1); b2: (1, 1).

    Returns sigmoid((x @ w1 + b1) @ w2 + b2), shape (B, 1).
    """
    B, F = x.shape

    # Exact algebraic fold of the two bias-only Linear layers (done once,
    # outside the kernel).
    w_eff = jnp.dot(w1, w2)                  # (F, 1)
    b_eff = jnp.dot(b1, w2) + b2             # (1, 1)
    w_row = w_eff.reshape(1, F)              # row operand for lane-dense GEMV

    # Batch tiling: TB multiple of 128 (lane-dense output), capped at block_rows.
    TB = min(block_rows, _round_up(B, 128))
    n_tiles = pl.cdiv(B, TB)
    Bp = n_tiles * TB
    if Bp != B:
        x = jnp.pad(x, ((0, Bp - B), (0, 0)))   # zero-pad ragged tail; discarded below

    out = pl.pallas_call(
        _folded_gemv_kernel,
        out_shape=jax.ShapeDtypeStruct((n_tiles, 1, TB), jnp.float32),
        grid=(n_tiles,),
        in_specs=[
            pl.BlockSpec((TB, F), lambda i: (i, 0)),          # x tile (pipelined)
            pl.BlockSpec((1, F), lambda i: (0, 0)),           # folded weights, resident
            pl.BlockSpec(memory_space=pltpu.MemorySpace.SMEM),  # folded bias scalar
        ],
        out_specs=pl.BlockSpec((1, 1, TB), lambda i: (i, 0, 0)),
        compiler_params=pltpu.CompilerParams(
            dimension_semantics=("parallel",),   # shard batch tiles across cores (v7x)
        ),
    )(x, w_row, b_eff)

    # (n_tiles, 1, TB) row-major flatten == batch order; drop padding rows.
    return out.reshape(Bp)[:B].reshape(B, 1)


def init_params(key, no_input_features, hidden=20, out=1):
    # Deterministic init mimicking torch.nn.Linear's U(-1/sqrt(fan_in), +1/sqrt(fan_in)).
    k1, k2, k3, k4 = jax.random.split(key, 4)
    lim1 = 1.0 / jnp.sqrt(no_input_features)
    lim2 = 1.0 / jnp.sqrt(hidden)
    # Stored already transposed: (in, out)
    w1 = jax.random.uniform(k1, (no_input_features, hidden), jnp.float32, -lim1, lim1)
    b1 = jax.random.uniform(k2, (1, hidden), jnp.float32, -lim1, lim1)
    w2 = jax.random.uniform(k3, (hidden, out), jnp.float32, -lim2, lim2)
    b2 = jax.random.uniform(k4, (1, out), jnp.float32, -lim2, lim2)
    return w1, b1, w2, b2


def _reference(x, w1, b1, w2, b2):
    return jax.nn.sigmoid((x @ w1 + b1) @ w2 + b2)


if __name__ == "__main__":
    key = jax.random.PRNGKey(0)
    kx, kp = jax.random.split(key)

    batch = 8
    no_input_features = 30  # breast-cancer feature count

    x = jax.random.normal(kx, (batch, no_input_features), jnp.float32)
    w1, b1, w2, b2 = init_params(kp, no_input_features)

    y = logistic_reg_forward(x, w1, b1, w2, b2)
    y = jax.block_until_ready(y)

    ref = _reference(x, w1, b1, w2, b2)
    assert y.shape == (batch, 1)
    # Folded algebra + EUP tanh change rounding order slightly (~1e-6 level).
    assert jnp.allclose(y, ref, atol=1e-4), "mismatch vs reference (small batch)"

    # Exercise the multi-tile (grid > 1) + ragged-padding path as well.
    batch2 = 260
    x2 = jax.random.normal(jax.random.PRNGKey(1), (batch2, no_input_features), jnp.float32)
    y2 = jax.block_until_ready(logistic_reg_forward(x2, w1, b1, w2, b2))
    ref2 = _reference(x2, w1, b1, w2, b2)
    assert y2.shape == (batch2, 1)
    assert jnp.allclose(y2, ref2, atol=1e-4), "mismatch vs reference (tiled batch)"

    print("KERNEL_OK")
</pallas_src>

<mosaic_0001>
module attributes {stable_mosaic.version = 11 : i64} {
  func.func @_folded_gemv_kernel(%arg0: i32, %arg1: memref<128x30xf32, #tpu.memory_space<vmem>>, %arg2: memref<1x30xf32, #tpu.memory_space<vmem>>, %arg3: memref<1x1xf32, #tpu.memory_space<smem>>, %arg4: memref<1x1x128xf32, #tpu.memory_space<vmem>>) attributes {dimension_semantics = [#tpu.dimension_semantics<parallel>], iteration_bounds = array<i64: 1>, scalar_prefetch = 0 : i64, scratch_operands = 0 : i64, tpu.core_type = #tpu.core_type<tc>, window_params = [{transform_indices = @transform_0, window_bounds = array<i64: 128, 30>}, {pipeline_mode = #tpu.pipeline_mode<synchronous>, transform_indices = @transform_1, window_bounds = array<i64: 1, 30>}, {transform_indices = @transform_2, window_bounds = array<i64: 1, 1>}, {transform_indices = @transform_3, window_bounds = array<i64: 1, 1, 128>}]} {
    %c0 = arith.constant 0 : index
    %c0_0 = arith.constant 0 : index
    %0 = vector.load %arg2[%c0, %c0_0] : memref<1x30xf32, #tpu.memory_space<vmem>>, vector<1x30xf32>
    %c0_1 = arith.constant 0 : index
    %c0_2 = arith.constant 0 : index
    %1 = vector.load %arg1[%c0_1, %c0_2] : memref<128x30xf32, #tpu.memory_space<vmem>>, vector<128x30xf32>
    %cst = arith.constant dense<0.000000e+00> : vector<1x128xf32>
    %2 = tpu.matmul %0, %1, %cst {dimension_numbers = #tpu.dot_dimension_numbers<[1], [1], [0], [0], [0, 0, 1, 0], [], []>} : vector<1x30xf32>, vector<128x30xf32>, vector<1x128xf32> -> vector<1x128xf32>
    %c0_3 = arith.constant 0 : index
    %c0_4 = arith.constant 0 : index
    %3 = memref.load %arg3[%c0_3, %c0_4] : memref<1x1xf32, #tpu.memory_space<smem>>
    %4 = vector.broadcast %3 : f32 to vector<1x128xf32>
    %5 = arith.addf %2, %4 : vector<1x128xf32>
    %cst_5 = arith.constant 5.000000e-01 : f32
    %6 = vector.broadcast %cst_5 : f32 to vector<1x128xf32>
    %7 = arith.mulf %6, %5 : vector<1x128xf32>
    %8 = math.tanh %7 : vector<1x128xf32>
    %cst_6 = arith.constant 5.000000e-01 : f32
    %9 = vector.broadcast %cst_6 : f32 to vector<1x128xf32>
    %10 = arith.mulf %9, %8 : vector<1x128xf32>
    %cst_7 = arith.constant 5.000000e-01 : f32
    %11 = vector.broadcast %cst_7 : f32 to vector<1x128xf32>
    %12 = arith.addf %10, %11 : vector<1x128xf32>
    %c0_8 = arith.constant 0 : index
    %c0_9 = arith.constant 0 : index
    %c0_10 = arith.constant 0 : index
    %13 = vector.load %arg4[%c0_8, %c0_9, %c0_10] : memref<1x1x128xf32, #tpu.memory_space<vmem>>, vector<1x1x128xf32>
    %14 = vector.shape_cast %13 : vector<1x1x128xf32> to vector<1x128xf32>
    %15 = vector.shape_cast %12 : vector<1x128xf32> to vector<1x1x128xf32>
    tpu.vector_store %arg4[%c0_8, %c0_9, %c0_10], %15 {strides = array<i32>} : memref<1x1x128xf32, #tpu.memory_space<vmem>>, vector<1x1x128xf32>,
    return
  }
  func.func @transform_0(%arg0: i32) -> (i32, i32) {
    %c0_i32 = arith.constant 0 : i32
    %c0_i32_0 = arith.constant 0 : i32
    return %arg0, %c0_i32 : i32, i32
  }
  func.func @transform_1(%arg0: i32) -> (i32, i32) {
    %c0_i32 = arith.constant 0 : i32
    %c0_i32_0 = arith.constant 0 : i32
    %c0_i32_1 = arith.constant 0 : i32
    return %c0_i32, %c0_i32_0 : i32, i32
  }
  func.func @transform_2(%arg0: i32) -> (i32, i32) {
    %c0_i32 = arith.constant 0 : i32
    %c0_i32_0 = arith.constant 0 : i32
    %c0_i32_1 = arith.constant 0 : i32
    return %c0_i32, %c0_i32_0 : i32, i32
  }
  func.func @transform_3(%arg0: i32) -> (i32, i32, i32) {
    %c0_i32 = arith.constant 0 : i32
    %c0_i32_0 = arith.constant 0 : i32
    %c0_i32_1 = arith.constant 0 : i32
    return %arg0, %c0_i32, %c0_i32_0 : i32, i32, i32
  }
}

</mosaic_0001>

<llo_original>
// kernel: tpu_custom_call.1
$region0: #{tpu_custom_call.1}
  #allocation0 [shape = 'u32[]', space=smem, size = 0x4, offset = 0x4, fixed_abs, tag = 'smem constant byte address 0x4 - core index']
  #allocation1 [shape = 'u32[144,128]{1,0:T(1,128)}', space=vmem, size = 0x12000, scoped, tag = 'internal scratch']
  #allocation2 [shape = 'f32[1,1]{1,0:T(1,128)S(6)}', space=smem, size = 0x200, scoped, tag = 'scoped memory for tpu_custom_call.1']
  %s0 = inlined_call_operand.vmem [shape: f32[128,30], index: 0, kind: input, shape index: {}]
  %s1 = inlined_call_operand.vmem [shape: f32[1,30], index: 1, kind: input, shape index: {}]
  %s2 = inlined_call_operand.<no memory space> [shape: f32[1,1], index: 2, kind: input, shape index: {}]
  %s3 = inlined_call_operand.hbm [shape: f32[1,1,128], index: 3, kind: output, shape index: {}]
  %s4 = sld [smem:[#allocation0]]
  $region22: #{tpu_custom_call.1} parent=0
    _
  %s6 = ssub.s32 1, %s4
  %s7 = scalar_select 0, %s6, %s4
  %8 = sst [smem:[#allocation2]] %s2
  $region1: #{tpu_custom_call.1} parent=0
    #allocation3 [shape = 'u8[512]{0}', space=vmem, size = 0x400, scoped, tag = 'output window, operand 0, single buffered']
    #allocation4 [shape = 's32[1]{0}', space=sflag, size = 0x4, scoped, tag = 'scoped memory for tpu_custom_call.1']
    %9 = vsyncpa [#allocation4], 0
    // Predicated region
    $region2: #{tpu_custom_call.1} parent=1 // pred_check
      _
    $region3: #{tpu_custom_call.1} parent=1 // pred_check_branch
      %11 = sbr.rel (0) target = $region5
    $region4: #{tpu_custom_call.1} parent=1 // pred_region
      _
    $region5: #{tpu_custom_call.1} parent=1 // pred_fallthru
      _
    // Predicated region
    $region6: #{tpu_custom_call.1} parent=1 // pred_check
      _
    $region7: #{tpu_custom_call.1} parent=1 // pred_check_branch
      %13 = sbr.rel (0) target = $region9
    $region8: #{tpu_custom_call.1} parent=1 // pred_region
      _
    $region9: #{tpu_custom_call.1} parent=1 // pred_fallthru
      _
    // Predicated region
    $region10: #{tpu_custom_call.1} parent=1 // pred_check
      _
    $region11: #{tpu_custom_call.1} parent=1 // pred_check_branch
      %15 = sbr.rel (0) target = $region13
    $region12: #{tpu_custom_call.1} parent=1 // pred_region
      _
    $region13: #{tpu_custom_call.1} parent=1 // pred_fallthru
      _
    %v16 = vld [vmem:[%s1] sm:$0x1]
    %v17 = vld [vmem:[%s0] sm:$0xff]
    %v18 = vld [vmem:[%s0 + $0x8] sm:$0xff]
    %v19 = vld [vmem:[%s0 + $0x10] sm:$0xff]
    %v20 = vld [vmem:[%s0 + $0x18] sm:$0xff]
    %v21 = vld [vmem:[%s0 + $0x20] sm:$0xff]
    %v22 = vld [vmem:[%s0 + $0x28] sm:$0xff]
    %v23 = vld [vmem:[%s0 + $0x30] sm:$0xff]
    %v24 = vld [vmem:[%s0 + $0x38] sm:$0xff]
    %v25 = vld [vmem:[%s0 + $0x40] sm:$0xff]
    %v26 = vld [vmem:[%s0 + $0x48] sm:$0xff]
    %v27 = vld [vmem:[%s0 + $0x50] sm:$0xff]
    %v28 = vld [vmem:[%s0 + $0x58] sm:$0xff]
    %v29 = vld [vmem:[%s0 + $0x60] sm:$0xff]
    %v30 = vld [vmem:[%s0 + $0x68] sm:$0xff]
    %v31 = vld [vmem:[%s0 + $0x70] sm:$0xff]
    %v32 = vld [vmem:[%s0 + $0x78] sm:$0xff]
    %s33 = sld [smem:[#allocation2]]
    %v34 = vstv %s33
    %vm35 = vcmask 244736
    %v37 = vsel %vm35, %v16, 0
    %v40 = vsel %vm35, %v17, 0
    %v43 = vsel %vm35, %v18, 0
    %v46 = vsel %vm35, %v19, 0
    %v49 = vsel %vm35, %v20, 0
    %v52 = vsel %vm35, %v21, 0
    %v55 = vsel %vm35, %v22, 0
    %v58 = vsel %vm35, %v23, 0
    %v61 = vsel %vm35, %v24, 0
    %v64 = vsel %vm35, %v25, 0
    %v67 = vsel %vm35, %v26, 0
    %v70 = vsel %vm35, %v27, 0
    %v73 = vsel %vm35, %v28, 0
    %v76 = vsel %vm35, %v29, 0
    %v79 = vsel %vm35, %v30, 0
    %v82 = vsel %vm35, %v31, 0
    %v85 = vsel %vm35, %v32, 0
    %87 = vmatprep.subr.mxu0 0.0
    %88 = vmatpush1.xpose.msra.mxu0 %v40
    %89 = vmatprep.subr.mxu0 0.0
    %90 = vmatpush1.xpose.msra.mxu0 %v43
    %91 = vmatprep.subr.mxu0 0.0
    %92 = vmatpush1.xpose.msra.mxu0 %v46
    %93 = vmatprep.subr.mxu0 0.0
    %94 = vmatpush1.xpose.msra.mxu0 %v49
    %95 = vmatprep.subr.mxu0 0.0
    %96 = vmatpush1.xpose.msra.mxu0 %v52
    %97 = vmatprep.subr.mxu0 0.0
    %98 = vmatpush1.xpose.msra.mxu0 %v55
    %99 = vmatprep.subr.mxu0 0.0
    %100 = vmatpush1.xpose.msra.mxu0 %v58
    %101 = vmatprep.subr.mxu0 0.0
    %102 = vmatpush1.xpose.msra.mxu0 %v61
    %103 = vmatprep.subr.mxu0 0.0
    %104 = vmatpush1.xpose.msra.mxu0 %v64
    %105 = vmatprep.subr.mxu0 0.0
    %106 = vmatpush1.xpose.msra.mxu0 %v67
    %107 = vmatprep.subr.mxu0 0.0
    %108 = vmatpush1.xpose.msra.mxu0 %v70
    %109 = vmatprep.subr.mxu0 0.0
    %110 = vmatpush1.xpose.msra.mxu0 %v73
    %111 = vmatprep.subr.mxu0 0.0
    %112 = vmatpush1.xpose.msra.mxu0 %v76
    %113 = vmatprep.subr.mxu0 0.0
    %114 = vmatpush1.xpose.msra.mxu0 %v79
    %115 = vmatprep.subr.mxu0 0.0
    %116 = vmatpush1.xpose.msra.mxu0 %v82
    %117 = vmatprep.subr.mxu0 0.0
    %118 = vmatpush1.xpose.msra.mxu0 %v85
    %119 = vmatprep.subr.mxu0 0.0
    %120 = vmatpush1.xpose.msra.mxu0 0.0
    %121 = vmatprep.subr.mxu0 0.0
    %122 = vmatpush1.xpose.msra.mxu0 0.0
    %123 = vmatprep.subr.mxu0 0.0
    %124 = vmatpush1.xpose.msra.mxu0 0.0
    %125 = vmatprep.subr.mxu0 0.0
    %126 = vmatpush1.xpose.msra.mxu0 0.0
    %127 = vmatprep.subr.mxu0 0.0
    %128 = vmatpush1.xpose.msra.mxu0 0.0
    %129 = vmatprep.subr.mxu0 0.0
    %130 = vmatpush1.xpose.msra.mxu0 0.0
    %131 = vmatprep.subr.mxu0 0.0
    %132 = vmatpush1.xpose.msra.mxu0 0.0
    %133 = vmatprep.subr.mxu0 0.0
    %134 = vmatpush1.xpose.msra.mxu0 0.0
    %135 = vmatprep.subr.mxu0 0.0
    %136 = vmatpush1.xpose.msra.mxu0 0.0
    %137 = vmatprep.subr.mxu0 0.0
    %138 = vmatpush1.xpose.msra.mxu0 0.0
    %139 = vmatprep.subr.mxu0 0.0
    %140 = vmatpush1.xpose.msra.mxu0 0.0
    %141 = vmatprep.subr.mxu0 0.0
    %142 = vmatpush1.xpose.msra.mxu0 0.0
    %143 = vmatprep.subr.mxu0 0.0
    %144 = vmatpush1.xpose.msra.mxu0 0.0
    %145 = vmatprep.subr.mxu0 0.0
    %146 = vmatpush1.xpose.msra.mxu0 0.0
    %147 = vmatprep.subr.mxu0 0.0
    %148 = vmatpush1.xpose.msra.mxu0 0.0
    %149 = vmatprep.subr.mxu0 0.0
    %150 = vmatpush1.xpose.msra.mxu0 0.0
    %151 = vmatprep.mubr.f32.mxu0 0.0
    %152 = vmatmul.mubr.f32.gmra.mrb[0].mxu0 %v37
    %v153 = vpop.f32.mrb[0].mxu0
    %v154 = vadd.f32 %v34, %v153
    %v155 = vpop.f32.mrb[0].mxu0
    %156 = vdwg.mxu0
    %v157 = vmul.f32 %v154, 0.5
    %v158 = vtanh.pop %v157
    %v159 = vmul.f32 %v158, 0.5
    %v160 = vadd.f32 %v159, 0.5
    %161 = vst [vmem:[#allocation3] sm:$0x1] %v160
    // Predicated region
    $region14: #{tpu_custom_call.1} parent=1 // pred_check
      _
    $region15: #{tpu_custom_call.1} parent=1 // pred_check_branch
      %163 = sbr.rel (0) target = $region17
    $region16: #{tpu_custom_call.1} parent=1 // pred_region
      %s165 = ssub.s32 16, 16
      %166 = vsyncadd [#allocation4], %s165
      %s168 = sshll.u32 [#allocation3], 4
      %s169 = int_to_ptr.vmem [resolvable:$true] %s168
      %171 = dma.vmem_to_hbm [thread:$0]  %s169, 16, %s3, [#allocation4]
    $region17: #{tpu_custom_call.1} parent=1 // pred_fallthru
      _
    // Predicated region
    $region18: #{tpu_custom_call.1} parent=1 // pred_check
      _
    $region19: #{tpu_custom_call.1} parent=1 // pred_check_branch
      %173 = sbr.rel (0) target = $region21
    $region20: #{tpu_custom_call.1} parent=1 // pred_region
      %174 = dma.done [#allocation4], 16
    $region21: #{tpu_custom_call.1} parent=1 // pred_fallthru
      _
    %175 = vsyncpa [#allocation4], 1

</llo_original>
